<compile_context>
chip_gen: v5e
topology: v5e:2x2
jax: 0.10.0
libtpu: 0.0.40
codegen_flags: <defaults>
</compile_context>

<pallas_src>
import jax
import jax.numpy as jnp
import numpy as np
from jax.experimental import pallas as pl
from jax.experimental.pallas import tpu as pltpu

BN_EPS = 1e-5


def _td_kernel(x_ref, scale_ref, shift_ref, w_ref, b_ref, o_ref):
    # x_ref:    (C_in, ts)   activation slab (C_in on sublanes, spatial on lanes)
    # scale/shift: (C_in, 1) f32 fused BatchNorm affine
    # w_ref:    (C_out, C_in)   1x1 conv weight
    # b_ref:    (C_out, 1) f32  conv bias
    # o_ref:    (C_out, ts)
    x = x_ref[...].astype(jnp.float32)                 # keep elementwise math in f32 (v5e-safe)
    xn = x * scale_ref[...] + shift_ref[...]           # BatchNorm2d (eval), pre-fused affine
    xr = jnp.maximum(xn, 0.0)                          # ReLU
    w = w_ref[...]
    y = jnp.dot(w, xr.astype(w.dtype),                 # 1x1 Conv == channel matmul (MXU)
                preferred_element_type=jnp.float32)
    o_ref[...] = (y + b_ref[...]).astype(o_ref.dtype)


def _pick_block_s(S, n_batch, target):
    """Spatial (lane) tile size: multiple of 128 (or == S), big, and >=2 grid steps."""
    target = max(128, int(target))
    if S <= target:
        ts = S                                  # full spatial extent in one block
    else:
        ts = (target // 128) * 128              # large lane-dense tile
    # Keep at least 2 grid steps so both v7x TensorCores get work.
    if n_batch * pl.cdiv(S, ts) < 2 and S >= 256:
        ts = ((S + 1) // 2 + 127) // 128 * 128
    return ts


def transition_down(x_nchw, gamma, beta, run_mean, run_var, w, b,
                    *, block_s=4096, compute_dtype=None):
    """x_nchw: (N, C_in, H, W).  w: (C_out, C_in), b: (C_out,).
    Returns (N, C_out, ceil(H/2), ceil(W/2)) in NCHW, dtype = compute_dtype or x dtype."""
    N, C, H, W = x_nchw.shape
    C_out = w.shape[0]
    in_dtype = compute_dtype if compute_dtype is not None else x_nchw.dtype

    # MaxPool2d(kernel_size=1, stride=2): pure strided pick; commutes with the
    # pointwise BN/ReLU/1x1-conv, so subsample first (single XLA pass, quarter size).
    xs = x_nchw[:, :, ::2, ::2]
    Ho, Wo = xs.shape[2], xs.shape[3]
    S = Ho * Wo
    xs = xs.reshape(N, C, S).astype(in_dtype)          # free row-major reshape, NCHW kept

    # Fused BatchNorm (eval) affine.
    scale = (gamma * jax.lax.rsqrt(run_var + BN_EPS)).astype(jnp.float32)
    shift = (beta - run_mean * scale).astype(jnp.float32)
    scale2 = scale.reshape(C, 1)
    shift2 = shift.reshape(C, 1)
    w_mat = w.astype(in_dtype)                          # (C_out, C_in): out = W @ slab
    b2 = b.astype(jnp.float32).reshape(C_out, 1)

    ts = _pick_block_s(S, N, block_s)
    grid = (N, pl.cdiv(S, ts))

    out = pl.pallas_call(
        _td_kernel,
        out_shape=jax.ShapeDtypeStruct((N, C_out, S), in_dtype),
        grid_spec=pltpu.PrefetchScalarGridSpec(
            num_scalar_prefetch=0,
            grid=grid,
            in_specs=[
                pl.BlockSpec((None, C, ts), lambda n, s: (n, 0, s)),   # activations
                pl.BlockSpec((C, 1), lambda n, s: (0, 0)),             # BN scale
                pl.BlockSpec((C, 1), lambda n, s: (0, 0)),             # BN shift
                pl.BlockSpec((C_out, C), lambda n, s: (0, 0)),         # conv weight
                pl.BlockSpec((C_out, 1), lambda n, s: (0, 0)),         # conv bias
            ],
            out_specs=pl.BlockSpec((None, C_out, ts), lambda n, s: (n, 0, s)),
        ),
        compiler_params=pltpu.CompilerParams(
            dimension_semantics=("parallel", "parallel")),
    )(xs, scale2, shift2, w_mat, b2)

    return out.reshape(N, C_out, Ho, Wo)                # already NCHW, free reshape


def _reference(x_nchw, gamma, beta, run_mean, run_var, w, b):
    # Pure-JAX reference with the literal op order: BN -> ReLU -> 1x1 conv -> (dropout=id) -> pool.
    inv = jax.lax.rsqrt(run_var + BN_EPS)
    xn = (x_nchw - run_mean[None, :, None, None]) * inv[None, :, None, None]
    xn = xn * gamma[None, :, None, None] + beta[None, :, None, None]
    xr = jnp.maximum(xn, 0.0)
    y = jnp.einsum("nchw,oc->nohw", xr, w) + b[None, :, None, None]
    return y[:, :, ::2, ::2]


if __name__ == "__main__":
    in_channels, out_channels = 48, 12
    N, H, W = 2, 16, 16

    key = jax.random.PRNGKey(0)
    kx, kw, kb, km, kv, kg, kbe = jax.random.split(key, 7)

    x = jax.random.normal(kx, (N, in_channels, H, W), dtype=jnp.float32)

    # Deterministic synthetic parameters (shapes match Conv2d(48,12,1) + BatchNorm2d(48)).
    w = jax.random.normal(kw, (out_channels, in_channels), dtype=jnp.float32) * 0.1
    b = jax.random.normal(kb, (out_channels,), dtype=jnp.float32) * 0.1
    run_mean = jax.random.normal(km, (in_channels,), dtype=jnp.float32) * 0.05
    run_var = jax.nn.softplus(jax.random.normal(kv, (in_channels,), dtype=jnp.float32)) + 0.5
    gamma = 1.0 + 0.1 * jax.random.normal(kg, (in_channels,), dtype=jnp.float32)
    beta = 0.1 * jax.random.normal(kbe, (in_channels,), dtype=jnp.float32)

    # f32 path: tight correctness check.
    out = transition_down(x, gamma, beta, run_mean, run_var, w, b)
    out = jax.block_until_ready(out)
    ref = _reference(x, gamma, beta, run_mean, run_var, w, b)
    assert out.shape == (N, out_channels, H // 2, W // 2), out.shape
    np.testing.assert_allclose(np.asarray(out), np.asarray(ref), rtol=1e-5, atol=1e-5)

    # bf16 activation/weight storage (halves HBM traffic on v6e/v7x): loose check.
    out_bf16 = transition_down(x, gamma, beta, run_mean, run_var, w, b,
                               compute_dtype=jnp.bfloat16)
    out_bf16 = jax.block_until_ready(out_bf16)
    x_q = x.astype(jnp.bfloat16).astype(jnp.float32)
    w_q = w.astype(jnp.bfloat16).astype(jnp.float32)
    ref_bf16 = _reference(x_q, gamma, beta, run_mean, run_var, w_q, b)
    np.testing.assert_allclose(np.asarray(out_bf16, dtype=np.float32),
                               np.asarray(ref_bf16), rtol=5e-2, atol=5e-2)

    print("KERNEL_OK")
</pallas_src>

<mosaic_0001>
module attributes {stable_mosaic.version = 11 : i64} {
  func.func @_td_kernel(%arg0: i32, %arg1: i32, %arg2: memref<1x48x64xf32, #tpu.memory_space<vmem>>, %arg3: memref<48x1xf32, #tpu.memory_space<vmem>>, %arg4: memref<48x1xf32, #tpu.memory_space<vmem>>, %arg5: memref<12x48xf32, #tpu.memory_space<vmem>>, %arg6: memref<12x1xf32, #tpu.memory_space<vmem>>, %arg7: memref<1x12x64xf32, #tpu.memory_space<vmem>>) attributes {dimension_semantics = [#tpu.dimension_semantics<parallel>, #tpu.dimension_semantics<parallel>], iteration_bounds = array<i64: 2, 1>, scalar_prefetch = 0 : i64, scratch_operands = 0 : i64, tpu.core_type = #tpu.core_type<tc>, window_params = [{transform_indices = @transform_0, window_bounds = array<i64: 1, 48, 64>}, {pipeline_mode = #tpu.pipeline_mode<synchronous>, transform_indices = @transform_1, window_bounds = array<i64: 48, 1>}, {pipeline_mode = #tpu.pipeline_mode<synchronous>, transform_indices = @transform_2, window_bounds = array<i64: 48, 1>}, {pipeline_mode = #tpu.pipeline_mode<synchronous>, transform_indices = @transform_3, window_bounds = array<i64: 12, 48>}, {pipeline_mode = #tpu.pipeline_mode<synchronous>, transform_indices = @transform_4, window_bounds = array<i64: 12, 1>}, {transform_indices = @transform_5, window_bounds = array<i64: 1, 12, 64>}]} {
    %c0 = arith.constant 0 : index
    %c0_0 = arith.constant 0 : index
    %c0_1 = arith.constant 0 : index
    %0 = vector.load %arg2[%c0, %c0_0, %c0_1] : memref<1x48x64xf32, #tpu.memory_space<vmem>>, vector<1x48x64xf32>
    %1 = vector.shape_cast %0 : vector<1x48x64xf32> to vector<48x64xf32>
    %c0_2 = arith.constant 0 : index
    %c0_3 = arith.constant 0 : index
    %2 = vector.load %arg3[%c0_2, %c0_3] : memref<48x1xf32, #tpu.memory_space<vmem>>, vector<48x1xf32>
    %3 = vector.broadcast %2 : vector<48x1xf32> to vector<48x64xf32>
    %4 = arith.mulf %1, %3 : vector<48x64xf32>
    %c0_4 = arith.constant 0 : index
    %c0_5 = arith.constant 0 : index
    %5 = vector.load %arg4[%c0_4, %c0_5] : memref<48x1xf32, #tpu.memory_space<vmem>>, vector<48x1xf32>
    %6 = vector.broadcast %5 : vector<48x1xf32> to vector<48x64xf32>
    %7 = arith.addf %4, %6 : vector<48x64xf32>
    %cst = arith.constant 0.000000e+00 : f32
    %8 = vector.broadcast %cst : f32 to vector<48x64xf32>
    %9 = arith.maximumf %7, %8 : vector<48x64xf32>
    %c0_6 = arith.constant 0 : index
    %c0_7 = arith.constant 0 : index
    %10 = vector.load %arg5[%c0_6, %c0_7] : memref<12x48xf32, #tpu.memory_space<vmem>>, vector<12x48xf32>
    %cst_8 = arith.constant dense<0.000000e+00> : vector<12x64xf32>
    %11 = tpu.matmul %10, %9, %cst_8 {dimension_numbers = #tpu.dot_dimension_numbers<[1], [0], [0], [1], [0, 0, 1, 1], [], []>} : vector<12x48xf32>, vector<48x64xf32>, vector<12x64xf32> -> vector<12x64xf32>
    %c0_9 = arith.constant 0 : index
    %c0_10 = arith.constant 0 : index
    %12 = vector.load %arg6[%c0_9, %c0_10] : memref<12x1xf32, #tpu.memory_space<vmem>>, vector<12x1xf32>
    %13 = vector.broadcast %12 : vector<12x1xf32> to vector<12x64xf32>
    %14 = arith.addf %11, %13 : vector<12x64xf32>
    %c0_11 = arith.constant 0 : index
    %c0_12 = arith.constant 0 : index
    %c0_13 = arith.constant 0 : index
    %15 = vector.load %arg7[%c0_11, %c0_12, %c0_13] : memref<1x12x64xf32, #tpu.memory_space<vmem>>, vector<1x12x64xf32>
    %16 = vector.shape_cast %15 : vector<1x12x64xf32> to vector<12x64xf32>
    %17 = vector.shape_cast %14 : vector<12x64xf32> to vector<1x12x64xf32>
    tpu.vector_store %arg7[%c0_11, %c0_12, %c0_13], %17 {strides = array<i32>} : memref<1x12x64xf32, #tpu.memory_space<vmem>>, vector<1x12x64xf32>,
    return
  }
  func.func @transform_0(%arg0: i32, %arg1: i32) -> (i32, i32, i32) {
    %c0_i32 = arith.constant 0 : i32
    %c0_i32_0 = arith.constant 0 : i32
    return %arg0, %c0_i32, %arg1 : i32, i32, i32
  }
  func.func @transform_1(%arg0: i32, %arg1: i32) -> (i32, i32) {
    %c0_i32 = arith.constant 0 : i32
    %c0_i32_0 = arith.constant 0 : i32
    %c0_i32_1 = arith.constant 0 : i32
    return %c0_i32, %c0_i32_0 : i32, i32
  }
  func.func @transform_2(%arg0: i32, %arg1: i32) -> (i32, i32) {
    %c0_i32 = arith.constant 0 : i32
    %c0_i32_0 = arith.constant 0 : i32
    %c0_i32_1 = arith.constant 0 : i32
    return %c0_i32, %c0_i32_0 : i32, i32
  }
  func.func @transform_3(%arg0: i32, %arg1: i32) -> (i32, i32) {
    %c0_i32 = arith.constant 0 : i32
    %c0_i32_0 = arith.constant 0 : i32
    %c0_i32_1 = arith.constant 0 : i32
    return %c0_i32, %c0_i32_0 : i32, i32
  }
  func.func @transform_4(%arg0: i32, %arg1: i32) -> (i32, i32) {
    %c0_i32 = arith.constant 0 : i32
    %c0_i32_0 = arith.constant 0 : i32
    %c0_i32_1 = arith.constant 0 : i32
    return %c0_i32, %c0_i32_0 : i32, i32
  }
  func.func @transform_5(%arg0: i32, %arg1: i32) -> (i32, i32, i32) {
    %c0_i32 = arith.constant 0 : i32
    %c0_i32_0 = arith.constant 0 : i32
    return %arg0, %c0_i32, %arg1 : i32, i32, i32
  }
}

</mosaic_0001>

<llo_original>
// kernel: tpu_custom_call.1
$region0: #{tpu_custom_call.1}
  #allocation0 [shape = 'u32[]', space=smem, size = 0x4, offset = 0x4, fixed_abs, tag = 'smem constant byte address 0x4 - core index']
  #allocation1 [shape = 'u32[72,128]{1,0:T(1,128)}', space=vmem, size = 0x9000, scoped, tag = 'internal scratch']
  %s0 = inlined_call_operand.vmem [shape: f32[2,48,64], index: 0, kind: input, shape index: {}]
  %s1 = inlined_call_operand.vmem [shape: f32[48,1], index: 1, kind: input, shape index: {}]
  %s2 = inlined_call_operand.vmem [shape: f32[48,1], index: 2, kind: input, shape index: {}]
  %s3 = inlined_call_operand.vmem [shape: f32[12,48], index: 3, kind: input, shape index: {}]
  %s4 = inlined_call_operand.vmem [shape: f32[12,1], index: 4, kind: input, shape index: {}]
  %s5 = inlined_call_operand.vmem [shape: f32[2,12,64], index: 5, kind: output, shape index: {}]
  %s6 = sld [smem:[#allocation0]]
  $region53: #{tpu_custom_call.1} parent=0
    _
  %s8 = ssub.s32 1, %s6
  %s9 = scalar_select 0, %s8, %s6
  loop: start=0, step=1, limit=4
  $region2: #{tpu_custom_call.1} parent=0 // loop_pre_header
    _
  $region3: #{tpu_custom_call.1} parent=0 // loop_header
    %s11 = sphi 0, %s15
    %p12 = scmp.ge.s32.totalorder %s11, 4
    %s18 = sphi 0, %s30
    %s19 = sphi 0, %s26
    %s20 = sphi 0, %s18
    %s21 = sphi 0, %s19
    %s22 = sphi 0, %s20
    %s23 = sphi 0, %s21
    %s35 = sphi 0, %s37
    %s38 = sphi 0, %s35
    %s39 = sphi 0, %s38
    %s55 = sphi 0, %s39
    %s59 = sphi 0, %s59
    %s61 = sphi 0, %s59
    %s62 = sphi 0, %s61
    %s76 = sphi 0, %s62
    %s80 = sphi 0, %s80
    %s82 = sphi 0, %s80
    %s83 = sphi 0, %s82
    %s97 = sphi 0, %s83
    %s101 = sphi 0, %s101
    %s103 = sphi 0, %s101
    %s104 = sphi 0, %s103
    %s118 = sphi 0, %s104
    %s122 = sphi 0, %s122
    %s124 = sphi 0, %s122
    %s125 = sphi 0, %s124
    %s139 = sphi 0, %s125
    %s147 = sphi 0, %s149
    %s150 = sphi 0, %s147
    %s151 = sphi 0, %s150
    %s167 = sphi 0, %s151
  $region4: #{tpu_custom_call.1} parent=0 // loop_header_branch
    %14 = sbr.rel (%p12) target = $region8
  $region5: #{tpu_custom_call.1} parent=0 // loop_body
    %s16 = ssub.s32 %s11, 1
    %s17 = ssub.s32 %s11, 2
    %s24 = sadd.s32 1, %s19
    %p25 = scmp.ge.s32.totalorder %s24, 1
    %s26 = scalar_select %p25, 0, %s24
    %s27 = sadd.s32 1, %s18
    %s28 = scalar_select %p25, %s27, %s18
    %p29 = scmp.ge.s32.totalorder %s28, 2
    %s30 = scalar_select %p29, 0, %s28
    %s31 = ssub.s32 %s18, %s30
    %s32 = ssub.s32 %s19, %s26
    %s33 = sor.u32 %s31, %s32
    %p34 = scmp.eq.s32.totalorder %s33, 0
    %s36 = sadd.s32 %s35, 1
    %s37 = scalar_select %p34, %s35, %s36
    %p40 = pneg %p34
    %p41 = scmp.eq.s32.totalorder %s11, 1
    %p42 = por %p40, %p41
    %p43 = scmp.ne.s32.totalorder %s35, %s38
    %p44 = scmp.eq.s32.totalorder %s11, 0
    %p45 = por %p43, %p44
    %p46 = scmp.ne.s32.totalorder %s35, %s38
    %p47 = scmp.eq.s32.totalorder %s16, 1
    %p48 = por %p46, %p47
    %p49 = scmp.ne.s32.totalorder %s38, %s39
    %p50 = scmp.eq.s32.totalorder %s16, 0
    %p51 = por %p49, %p50
    %p52 = scmp.ne.s32.totalorder %s38, %s39
    %p53 = scmp.eq.s32.totalorder %s17, 1
    %p54 = por %p52, %p53
    %p56 = scmp.ne.s32.totalorder %s39, %s55
    %p57 = scmp.eq.s32.totalorder %s17, 0
    %p58 = por %p56, %p57
    %s60 = sadd.s32 %s59, 1
    %p63 = scmp.eq.s32.totalorder %s11, 1
    %p64 = scmp.ne.s32.totalorder %s59, %s61
    %p65 = scmp.eq.s32.totalorder %s11, 0
    %p66 = por %p64, %p65
    %p67 = scmp.ne.s32.totalorder %s59, %s61
    %p68 = scmp.eq.s32.totalorder %s16, 1
    %p69 = por %p67, %p68
    %p70 = scmp.ne.s32.totalorder %s61, %s62
    %p71 = scmp.eq.s32.totalorder %s16, 0
    %p72 = por %p70, %p71
    %p73 = scmp.ne.s32.totalorder %s61, %s62
    %p74 = scmp.eq.s32.totalorder %s17, 1
    %p75 = por %p73, %p74
    %p77 = scmp.ne.s32.totalorder %s62, %s76
    %p78 = scmp.eq.s32.totalorder %s17, 0
    %p79 = por %p77, %p78
    %s81 = sadd.s32 %s80, 1
    %p84 = scmp.eq.s32.totalorder %s11, 1
    %p85 = scmp.ne.s32.totalorder %s80, %s82
    %p86 = scmp.eq.s32.totalorder %s11, 0
    %p87 = por %p85, %p86
    %p88 = scmp.ne.s32.totalorder %s80, %s82
    %p89 = scmp.eq.s32.totalorder %s16, 1
    %p90 = por %p88, %p89
    %p91 = scmp.ne.s32.totalorder %s82, %s83
    %p92 = scmp.eq.s32.totalorder %s16, 0
    %p93 = por %p91, %p92
    %p94 = scmp.ne.s32.totalorder %s82, %s83
    %p95 = scmp.eq.s32.totalorder %s17, 1
    %p96 = por %p94, %p95
    %p98 = scmp.ne.s32.totalorder %s83, %s97
    %p99 = scmp.eq.s32.totalorder %s17, 0
    %p100 = por %p98, %p99
    %s102 = sadd.s32 %s101, 1
    %p105 = scmp.eq.s32.totalorder %s11, 1
    %p106 = scmp.ne.s32.totalorder %s101, %s103
    %p107 = scmp.eq.s32.totalorder %s11, 0
    %p108 = por %p106, %p107
    %p109 = scmp.ne.s32.totalorder %s101, %s103
    %p110 = scmp.eq.s32.totalorder %s16, 1
    %p111 = por %p109, %p110
    %p112 = scmp.ne.s32.totalorder %s103, %s104
    %p113 = scmp.eq.s32.totalorder %s16, 0
    %p114 = por %p112, %p113
    %p115 = scmp.ne.s32.totalorder %s103, %s104
    %p116 = scmp.eq.s32.totalorder %s17, 1
    %p117 = por %p115, %p116
    %p119 = scmp.ne.s32.totalorder %s104, %s118
    %p120 = scmp.eq.s32.totalorder %s17, 0
    %p121 = por %p119, %p120
    %s123 = sadd.s32 %s122, 1
    %p126 = scmp.eq.s32.totalorder %s11, 1
    %p127 = scmp.ne.s32.totalorder %s122, %s124
    %p128 = scmp.eq.s32.totalorder %s11, 0
    %p129 = por %p127, %p128
    %p130 = scmp.ne.s32.totalorder %s122, %s124
    %p131 = scmp.eq.s32.totalorder %s16, 1
    %p132 = por %p130, %p131
    %p133 = scmp.ne.s32.totalorder %s124, %s125
    %p134 = scmp.eq.s32.totalorder %s16, 0
    %p135 = por %p133, %p134
    %p136 = scmp.ne.s32.totalorder %s124, %s125
    %p137 = scmp.eq.s32.totalorder %s17, 1
    %p138 = por %p136, %p137
    %p140 = scmp.ne.s32.totalorder %s125, %s139
    %p141 = scmp.eq.s32.totalorder %s17, 0
    %p142 = por %p140, %p141
    %s143 = ssub.s32 %s18, %s30
    %s144 = ssub.s32 %s19, %s26
    %s145 = sor.u32 %s143, %s144
    %p146 = scmp.eq.s32.totalorder %s145, 0
    %s148 = sadd.s32 %s147, 1
    %s149 = scalar_select %p146, %s147, %s148
    %p152 = pneg %p146
    %p153 = scmp.eq.s32.totalorder %s11, 1
    %p154 = por %p152, %p153
    %p155 = scmp.ne.s32.totalorder %s147, %s150
    %p156 = scmp.eq.s32.totalorder %s11, 0
    %p157 = por %p155, %p156
    %p158 = scmp.ne.s32.totalorder %s147, %s150
    %p159 = scmp.eq.s32.totalorder %s16, 1
    %p160 = por %p158, %p159
    %p161 = scmp.ne.s32.totalorder %s150, %s151
    %p162 = scmp.eq.s32.totalorder %s16, 0
    %p163 = por %p161, %p162
    %p164 = scmp.ne.s32.totalorder %s150, %s151
    %p165 = scmp.eq.s32.totalorder %s17, 1
    %p166 = por %p164, %p165
    %p168 = scmp.ne.s32.totalorder %s151, %s167
    %p169 = scmp.eq.s32.totalorder %s17, 0
    %p170 = por %p168, %p169
    %p171 = scmp.le.s32.totalorder 1, %s11
    %p172 = scmp.lt.s32.totalorder %s11, 3
    %p173 = pnand %p171, %p172
    %p174 = pneg %p173
    // Predicated region
    $region9: #{tpu_custom_call.1} parent=5 // pred_check
      _
    $region10: #{tpu_custom_call.1} parent=5 // pred_check_branch
      %176 = sbr.rel (%p173) target = $region12
    $region11: #{tpu_custom_call.1} parent=5 // pred_region
      %s177 = ssub.s32 %s11, 1
      // Predicated region
      $region13: #{tpu_custom_call.1} parent=11 // pred_check
        %p178 = pneg %p72
      $region14: #{tpu_custom_call.1} parent=11 // pred_check_branch
        %180 = sbr.rel (%p178) target = $region16
      $region15: #{tpu_custom_call.1} parent=11 // pred_region
        _
      $region16: #{tpu_custom_call.1} parent=11 // pred_fallthru
        _
      // Predicated region
      $region17: #{tpu_custom_call.1} parent=11 // pred_check
        %p181 = pneg %p93
      $region18: #{tpu_custom_call.1} parent=11 // pred_check_branch
        %183 = sbr.rel (%p181) target = $region20
      $region19: #{tpu_custom_call.1} parent=11 // pred_region
        _
      $region20: #{tpu_custom_call.1} parent=11 // pred_fallthru
        _
      // Predicated region
      $region21: #{tpu_custom_call.1} parent=11 // pred_check
        %p184 = pneg %p114
      $region22: #{tpu_custom_call.1} parent=11 // pred_check_branch
        %186 = sbr.rel (%p184) target = $region24
      $region23: #{tpu_custom_call.1} parent=11 // pred_region
        _
      $region24: #{tpu_custom_call.1} parent=11 // pred_fallthru
        _
      // Predicated region
      $region25: #{tpu_custom_call.1} parent=11 // pred_check
        %p187 = pneg %p135
      $region26: #{tpu_custom_call.1} parent=11 // pred_check_branch
        %189 = sbr.rel (%p187) target = $region28
      $region27: #{tpu_custom_call.1} parent=11 // pred_region
        _
      $region28: #{tpu_custom_call.1} parent=11 // pred_fallthru
        _
    $region12: #{tpu_custom_call.1} parent=5 // pred_fallthru
      _
    %p190 = scmp.lt.s32.totalorder %s11, 2
    // Predicated region
    $region29: #{tpu_custom_call.1} parent=5 // pred_check
      %p191 = pneg %p190
    $region30: #{tpu_custom_call.1} parent=5 // pred_check_branch
      %193 = sbr.rel (%p191) target = $region32
    $region31: #{tpu_custom_call.1} parent=5 // pred_region
      // Predicated region
      $region33: #{tpu_custom_call.1} parent=31 // pred_check
        %p194 = pneg %p45
      $region34: #{tpu_custom_call.1} parent=31 // pred_check_branch
        %196 = sbr.rel (%p194) target = $region36
      $region35: #{tpu_custom_call.1} parent=31 // pred_region
        %p197 = scmp.lt.s32.totalorder %s18, 1
        %s198 = scalar_select %p197, %s18, 1
        %p199 = scmp.lt.s32.totalorder %s19, 0
        %s200 = scalar_select %p199, %s19, 0
        %s201 = smul.addr %s198, 6
        %s202 = sadd.s32 %s200, %s201
        %s203 = smul.addr %s202, 8
        %s204 = scalar_lea.vmem %s0, %s203
      $region36: #{tpu_custom_call.1} parent=31 // pred_fallthru
        _
    $region32: #{tpu_custom_call.1} parent=5 // pred_fallthru
      _
    %p205 = scmp.le.s32.totalorder 1, %s11
    %p206 = scmp.lt.s32.totalorder %s11, 3
    %p207 = pnand %p205, %p206
    %p208 = pneg %p207
    // Predicated region
    $region37: #{tpu_custom_call.1} parent=5 // pred_check
      _
    $region38: #{tpu_custom_call.1} parent=5 // pred_check_branch
      %210 = sbr.rel (%p207) target = $region40
    $region39: #{tpu_custom_call.1} parent=5 // pred_region
      %s211 = ssub.s32 %s11, 1
      %p212 = scmp.lt.s32.totalorder %s20, 1
      %s213 = scalar_select %p212, %s20, 1
      %p214 = scmp.lt.s32.totalorder %s21, 0
      %s215 = scalar_select %p214, %s21, 0
      %s216 = smul.addr %s213, 6
      %s217 = sadd.s32 %s215, %s216
      %s218 = smul.addr %s217, 8
      %s219 = scalar_lea.vmem %s0, %s218
      %p220 = pneg %p51
      %p221 = pneg %p48
      %p222 = pneg %p72
      %p223 = pneg %p69
      %p224 = pneg %p93
      %p225 = pneg %p90
      %p226 = pneg %p114
      %p227 = pneg %p111
      %p228 = pneg %p135
      %p229 = pneg %p132
      %p230 = pneg %p163
      %p231 = pneg %p160
      %p232 = scmp.lt.s32.totalorder %s20, 1
      %s233 = scalar_select %p232, %s20, 1
      %p234 = scmp.lt.s32.totalorder %s21, 0
      %s235 = scalar_select %p234, %s21, 0
      %s236 = smul.addr %s233, 2
      %s237 = sadd.s32 %s235, %s236
      %s238 = smul.addr %s237, 8
      %s239 = scalar_lea.vmem %s5, %s238
      %p240 = scmp.lt.s32.totalorder %s20, 1
      %s241 = scalar_select %p240, %s20, 1
      %p242 = scmp.lt.s32.totalorder %s21, 0
      %s243 = scalar_select %p242, %s21, 0
      %s244 = smul.addr %s241, 6
      %s245 = sadd.s32 %s243, %s244
      %s246 = smul.addr %s245, 8
      %s247 = scalar_lea.vmem %s0, %s246
      %p248 = scmp.lt.s32.totalorder %s20, 1
      %s249 = scalar_select %p248, %s20, 1
      %p250 = scmp.lt.s32.totalorder %s21, 0
      %s251 = scalar_select %p250, %s21, 0
      %s252 = smul.addr %s249, 2
      %s253 = sadd.s32 %s251, %s252
      %s254 = smul.addr %s253, 8
      %s255 = scalar_lea.vmem %s5, %s254
      %v256 = vld [vmem:[%s247] sm:$0xff]
      %v257 = vld [vmem:[%s247 + $0x8] sm:$0xff]
      %v258 = vld [vmem:[%s247 + $0x10] sm:$0xff]
      %v259 = vld [vmem:[%s247 + $0x18] sm:$0xff]
      %v260 = vld [vmem:[%s247 + $0x20] sm:$0xff]
      %v261 = vld [vmem:[%s247 + $0x28] sm:$0xff]
      %v262 = vld [vmem:[%s1] sm:$0xff]
      %v263 = vld [vmem:[%s1 + $0x8] sm:$0xff]
      %v264 = vld [vmem:[%s1 + $0x10] sm:$0xff]
      %v265 = vld [vmem:[%s1 + $0x18] sm:$0xff]
      %v266 = vld [vmem:[%s1 + $0x20] sm:$0xff]
      %v267 = vld [vmem:[%s1 + $0x28] sm:$0xff]
      %269 = vset.pattern.permute.xlu0 0
      %270 = vperm.xlu0 %269, %v262
      %v271 = vpop.permute.xlu0 %270
      %274 = vset.pattern.permute.xlu0 0
      %275 = vperm.xlu0 %274, %v263
      %v276 = vpop.permute.xlu0 %275
      %279 = vset.pattern.permute.xlu0 0
      %280 = vperm.xlu0 %279, %v264
      %v281 = vpop.permute.xlu0 %280
      %284 = vset.pattern.permute.xlu0 0
      %285 = vperm.xlu0 %284, %v265
      %v286 = vpop.permute.xlu0 %285
      %289 = vset.pattern.permute.xlu0 0
      %290 = vperm.xlu0 %289, %v266
      %v291 = vpop.permute.xlu0 %290
      %294 = vset.pattern.permute.xlu0 0
      %295 = vperm.xlu0 %294, %v267
      %v296 = vpop.permute.xlu0 %295
      %v298 = vmul.f32 %v256, %v271
      %v299 = vmul.f32 %v257, %v276
      %v300 = vmul.f32 %v258, %v281
      %v301 = vmul.f32 %v259, %v286
      %v302 = vmul.f32 %v260, %v291
      %v303 = vmul.f32 %v261, %v296
      %v304 = vld [vmem:[%s2] sm:$0xff]
      %v305 = vld [vmem:[%s2 + $0x8] sm:$0xff]
      %v306 = vld [vmem:[%s2 + $0x10] sm:$0xff]
      %v307 = vld [vmem:[%s2 + $0x18] sm:$0xff]
      %v308 = vld [vmem:[%s2 + $0x20] sm:$0xff]
      %v309 = vld [vmem:[%s2 + $0x28] sm:$0xff]
      %311 = vset.pattern.permute.xlu0 0
      %312 = vperm.xlu0 %311, %v304
      %v313 = vpop.permute.xlu0 %312
      %316 = vset.pattern.permute.xlu0 0
      %317 = vperm.xlu0 %316, %v305
      %v318 = vpop.permute.xlu0 %317
      %321 = vset.pattern.permute.xlu0 0
      %322 = vperm.xlu0 %321, %v306
      %v323 = vpop.permute.xlu0 %322
      %326 = vset.pattern.permute.xlu0 0
      %327 = vperm.xlu0 %326, %v307
      %v328 = vpop.permute.xlu0 %327
      %331 = vset.pattern.permute.xlu0 0
      %332 = vperm.xlu0 %331, %v308
      %v333 = vpop.permute.xlu0 %332
      %336 = vset.pattern.permute.xlu0 0
      %337 = vperm.xlu0 %336, %v309
      %v338 = vpop.permute.xlu0 %337
      %v340 = vadd.f32 %v298, %v313
      %v341 = vadd.f32 %v299, %v318
      %v342 = vadd.f32 %v300, %v323
      %v343 = vadd.f32 %v301, %v328
      %v344 = vadd.f32 %v302, %v333
      %v345 = vadd.f32 %v303, %v338
      %v346 = vmax.f32 %v340, 0.0
      %v347 = vmax.f32 %v341, 0.0
      %v348 = vmax.f32 %v342, 0.0
      %v349 = vmax.f32 %v343, 0.0
      %v350 = vmax.f32 %v344, 0.0
      %v351 = vmax.f32 %v345, 0.0
      %v352 = vld [vmem:[%s3] sm:$0xff]
      %v353 = vld [vmem:[%s3 + $0x8] sm:$0xf]
      %v354 = vld [vmem:[%s4] sm:$0xff]
      %v355 = vld [vmem:[%s4 + $0x8] sm:$0xf]
      %357 = vset.pattern.permute.xlu0 0
      %358 = vperm.xlu0 %357, %v354
      %v359 = vpop.permute.xlu0 %358
      %362 = vset.pattern.permute.xlu0 0
      %363 = vperm.xlu0 %362, %v355
      %v364 = vpop.permute.xlu0 %363
      %vm366 = vcmask 392192
      %v368 = vsel %vm366, %v352, 0
      %v371 = vsel %vm366, %v353, 0
      %373 = vmatpush.msra.mxu0 0.0
      %374 = vmatpush.msra.mxu0 0.0
      %375 = vmatpush.msra.mxu0 0.0
      %376 = vmatpush.msra.mxu0 0.0
      %377 = vmatpush.msra.mxu0 0.0
      %378 = vmatpush.msra.mxu0 0.0
      %379 = vmatpush.msra.mxu0 0.0
      %380 = vmatpush.msra.mxu0 0.0
      %381 = vmatpush.msra.mxu0 0.0
      %382 = vmatpush.msra.mxu0 0.0
      %383 = vmatpush.msra.mxu0 %v351
      %384 = vmatpush.msra.mxu0 %v350
      %385 = vmatpush.msra.mxu0 %v349
      %386 = vmatpush.msra.mxu0 %v348
      %387 = vmatpush.msra.mxu0 %v347
      %388 = vmatpush.msra.mxu0 %v346
      %389 = vmatmul.f32.gmra.mxu0 %v368
      %v390 = vpop.f32.mrf.mxu0
      %v391 = vadd.f32 %v359, %v390
      %392 = vmatmul.f32.gmra.mxu0 %v371
      %v393 = vpop.f32.mrf.mxu0
      %v394 = vadd.f32 %v364, %v393
      %395 = vdwg.mxu0
      %vm396 = vcmask 523264
      %397 = vst.msk [vmem:[%s255] sm:$0xff] %vm396, %v391
      %vm398 = vcmask 519168
      %399 = vst.msk [vmem:[%s255 + $0x8] sm:$0xf] %vm398, %v394
      %p400 = scmp.lt.s32.totalorder %s20, 1
      %s401 = scalar_select %p400, %s20, 1
      %p402 = scmp.lt.s32.totalorder %s21, 0
      %s403 = scalar_select %p402, %s21, 0
      %s404 = smul.addr %s401, 2
      %s405 = sadd.s32 %s403, %s404
      %s406 = smul.addr %s405, 8
      %s407 = scalar_lea.vmem %s5, %s406
      // Predicated region
      $region41: #{tpu_custom_call.1} parent=39 // pred_check
        %p408 = pneg %p160
      $region42: #{tpu_custom_call.1} parent=39 // pred_check_branch
        %410 = sbr.rel (%p408) target = $region44
      $region43: #{tpu_custom_call.1} parent=39 // pred_region
        _
      $region44: #{tpu_custom_call.1} parent=39 // pred_fallthru
        _
    $region40: #{tpu_custom_call.1} parent=5 // pred_fallthru
      _
    %p411 = scmp.le.s32.totalorder 2, %s11
    // Predicated region
    $region45: #{tpu_custom_call.1} parent=5 // pred_check
      %p412 = pneg %p411
    $region46: #{tpu_custom_call.1} parent=5 // pred_check_branch
      %414 = sbr.rel (%p412) target = $region48
    $region47: #{tpu_custom_call.1} parent=5 // pred_region
      %s415 = ssub.s32 %s11, 2
      // Predicated region
      $region49: #{tpu_custom_call.1} parent=47 // pred_check
        %p416 = pneg %p166
      $region50: #{tpu_custom_call.1} parent=47 // pred_check_branch
        %418 = sbr.rel (%p416) target = $region52
      $region51: #{tpu_custom_call.1} parent=47 // pred_region
        %p419 = scmp.lt.s32.totalorder %s22, 1
        %s420 = scalar_select %p419, %s22, 1
        %p421 = scmp.lt.s32.totalorder %s23, 0
        %s422 = scalar_select %p421, %s23, 0
        %s423 = smul.addr %s420, 2
        %s424 = sadd.s32 %s422, %s423
        %s425 = smul.addr %s424, 8
        %s426 = scalar_lea.vmem %s5, %s425
      $region52: #{tpu_custom_call.1} parent=47 // pred_fallthru
        _
    $region48: #{tpu_custom_call.1} parent=5 // pred_fallthru
      _
  $region6: #{tpu_custom_call.1} parent=0 // loop_footer
    %s15 = sadd.s32 1, %s11
  $region7: #{tpu_custom_call.1} parent=0 // loop_footer_branch
    %10 = sbr.rel target = $region3
  $region8: #{tpu_custom_call.1} parent=0 // loop_exit
    _

</llo_original>
